<compile_context>
chip_gen: v5e
topology: v5e:2x2
jax: 0.10.0
libtpu: 0.0.40
codegen_flags: <defaults>
</compile_context>

<pallas_src>
import jax
import jax.numpy as jnp
from jax.experimental import pallas as pl
from jax.experimental.pallas import tpu as pltpu

_LANE = 128
_SUBLANE_32BIT = 8


def _round_up(a: int, m: int) -> int:
    return ((a + m - 1) // m) * m


def _h_sigmoid_kernel(x_ref, o_ref):
    x = x_ref[...]
    dt = x.dtype
    inv6 = jnp.asarray(1.0 / 6.0, dt)
    half = jnp.asarray(0.5, dt)
    zero = jnp.asarray(0.0, dt)
    one = jnp.asarray(1.0, dt)
    # relu6(x + 3) / 6 == clamp(x/6 + 1/2, 0, 1); clamping after the scale
    # gives exact 0.0 / 1.0 endpoints (matches PyTorch saturation).
    y = jnp.minimum(jnp.maximum(x * inv6 + half, zero), one)
    o_ref[...] = y.astype(o_ref.dtype)


def h_sigmoid(x: jax.Array, *, target_block_bytes: int = 4 << 20) -> jax.Array:
    """Elementwise hard-sigmoid over any-shape tensor via a Pallas TPU kernel."""
    orig_shape = x.shape
    orig_dtype = x.dtype
    total = x.size
    itemsize = jnp.dtype(orig_dtype).itemsize

    # dtype-native sublane granularity: 8 rows f32, 16 rows bf16/f16, 32 rows int8/fp8
    sub = _SUBLANE_32BIT * max(1, 4 // itemsize)

    # Lane-only padding: pad the flat array to a multiple of 128 elements.
    # Most shapes (total % 128 == 0) skip the pad/slice HBM copies entirely;
    # ragged sublane rows of the last block are masked by Pallas.
    pad = (-total) % _LANE
    flat = x.reshape(-1)
    if pad:
        # TODO(synk): for very large ragged tensors, handle the <128-elem tail
        # outside the kernel instead of a whole-array pad + slice.
        flat = jnp.pad(flat, (0, pad))
    rows = (total + pad) // _LANE
    x2d = flat.reshape(rows, _LANE)

    # Block rows from the byte target, aligned to the native sublane tile.
    max_br = max(sub, (target_block_bytes // (_LANE * itemsize)) // sub * sub)

    if rows <= sub:
        # Tiny input: single full-extent block (block dims == array dims is legal).
        br = rows
    else:
        br = min(max_br, (rows // sub) * sub)
        # v7x megacore: aim for >= 4 grid steps (>= 2 double-buffered steps per
        # TensorCore) and an even count so both cores stay balanced.
        if rows >= 4 * sub:
            steps = pl.cdiv(rows, br)
            if steps < 4:
                steps = 4
            elif steps % 2 and steps < 16:
                steps += 1
            br = min(br, max(sub, _round_up(pl.cdiv(rows, steps), sub)))

    grid = (pl.cdiv(rows, br),)

    block_bytes = br * _LANE * itemsize
    # in + out, double-buffered (4x block) plus headroom; >= 32 MiB, <= 48 MiB
    # (safe under v7x's 64 MiB physical VMEM, lifts v5e's 16 MiB default).
    vmem_limit = min(48 << 20, max(32 << 20, 4 * block_bytes + (8 << 20)))

    out2d = pl.pallas_call(
        _h_sigmoid_kernel,
        out_shape=jax.ShapeDtypeStruct((rows, _LANE), orig_dtype),
        grid_spec=pltpu.PrefetchScalarGridSpec(
            num_scalar_prefetch=0,
            grid=grid,
            in_specs=[pl.BlockSpec((br, _LANE), lambda i: (i, 0))],
            out_specs=pl.BlockSpec((br, _LANE), lambda i: (i, 0)),
        ),
        compiler_params=pltpu.CompilerParams(
            dimension_semantics=("parallel",),
            vmem_limit_bytes=vmem_limit,
        ),
        cost_estimate=pl.CostEstimate(
            flops=4 * total,                                   # mul, add, max, min
            transcendentals=0,
            bytes_accessed=2 * rows * _LANE * itemsize,        # read + write incl. pad
        ),
    )(x2d)

    if pad:
        return out2d.reshape(-1)[:total].reshape(orig_shape)
    return out2d.reshape(orig_shape)


def _ref(x):
    return jnp.clip(x + 3.0, 0.0, 6.0) / 6.0


if __name__ == "__main__":
    key = jax.random.PRNGKey(0)

    # NCHW input matching the module's typical use: batch=2, channels=4, 16x16
    x = jax.random.normal(key, (2, 4, 16, 16), dtype=jnp.float32) * 4.0
    y = jax.block_until_ready(h_sigmoid(x))
    assert y.shape == x.shape and y.dtype == x.dtype
    assert jnp.allclose(y, _ref(x), atol=1e-6), "mismatch vs reference"

    # Ragged shape (total not a multiple of 128) -> exercises the padding path
    x2 = jax.random.normal(jax.random.PRNGKey(1), (2, 3, 7, 11), dtype=jnp.float32) * 4.0
    y2 = jax.block_until_ready(h_sigmoid(x2))
    assert jnp.allclose(y2, _ref(x2), atol=1e-6), "mismatch vs reference (padded path)"

    # Medium f32 shape -> exercises the multi-step grid + partial last block
    x3 = jax.random.normal(jax.random.PRNGKey(2), (2, 16, 56, 56), dtype=jnp.float32) * 4.0
    y3 = jax.block_until_ready(h_sigmoid(x3))
    assert jnp.allclose(y3, _ref(x3), atol=1e-6), "mismatch vs reference (multi-step)"

    # bf16 input -> exercises the 16-row native sublane granularity path
    x4 = (jax.random.normal(jax.random.PRNGKey(3), (2, 8, 32, 32), dtype=jnp.float32) * 4.0
          ).astype(jnp.bfloat16)
    y4 = jax.block_until_ready(h_sigmoid(x4))
    assert y4.dtype == jnp.bfloat16
    assert jnp.allclose(y4.astype(jnp.float32), _ref(x4.astype(jnp.float32)),
                        atol=1e-2), "mismatch vs reference (bf16)"

    print("KERNEL_OK")
</pallas_src>

<mosaic_0001>
module attributes {stable_mosaic.version = 11 : i64} {
  func.func @_h_sigmoid_kernel(%arg0: i32, %arg1: memref<16x128xf32, #tpu.memory_space<vmem>>, %arg2: memref<16x128xf32, #tpu.memory_space<vmem>>) attributes {dimension_semantics = [#tpu.dimension_semantics<parallel>], iteration_bounds = array<i64: 1>, scalar_prefetch = 0 : i64, scratch_operands = 0 : i64, tpu.core_type = #tpu.core_type<tc>, window_params = [{transform_indices = @transform_0, window_bounds = array<i64: 16, 128>}, {transform_indices = @transform_1, window_bounds = array<i64: 16, 128>}]} {
    %c0 = arith.constant 0 : index
    %c0_0 = arith.constant 0 : index
    %0 = vector.load %arg1[%c0, %c0_0] : memref<16x128xf32, #tpu.memory_space<vmem>>, vector<16x128xf32>
    %cst = arith.constant 0.166666672 : f32
    %1 = vector.broadcast %cst : f32 to vector<16x128xf32>
    %2 = arith.mulf %0, %1 : vector<16x128xf32>
    %cst_1 = arith.constant 5.000000e-01 : f32
    %3 = vector.broadcast %cst_1 : f32 to vector<16x128xf32>
    %4 = arith.addf %2, %3 : vector<16x128xf32>
    %cst_2 = arith.constant 0.000000e+00 : f32
    %5 = vector.broadcast %cst_2 : f32 to vector<16x128xf32>
    %6 = arith.maximumf %4, %5 : vector<16x128xf32>
    %cst_3 = arith.constant 1.000000e+00 : f32
    %7 = vector.broadcast %cst_3 : f32 to vector<16x128xf32>
    %8 = arith.minimumf %6, %7 : vector<16x128xf32>
    %c0_4 = arith.constant 0 : index
    %c0_5 = arith.constant 0 : index
    %9 = vector.load %arg2[%c0_4, %c0_5] : memref<16x128xf32, #tpu.memory_space<vmem>>, vector<16x128xf32>
    tpu.vector_store %arg2[%c0_4, %c0_5], %8 {strides = array<i32>} : memref<16x128xf32, #tpu.memory_space<vmem>>, vector<16x128xf32>,
    return
  }
  func.func @transform_0(%arg0: i32) -> (i32, i32) {
    %c0_i32 = arith.constant 0 : i32
    %c0_i32_0 = arith.constant 0 : i32
    return %arg0, %c0_i32 : i32, i32
  }
  func.func @transform_1(%arg0: i32) -> (i32, i32) {
    %c0_i32 = arith.constant 0 : i32
    %c0_i32_0 = arith.constant 0 : i32
    return %arg0, %c0_i32 : i32, i32
  }
}

</mosaic_0001>

<llo_original>
// kernel: tpu_custom_call.1
$region0: #{tpu_custom_call.1}
  #allocation0 [shape = 'u32[]', space=smem, size = 0x4, offset = 0x4, fixed_abs, tag = 'smem constant byte address 0x4 - core index']
  #allocation1 [shape = 'u32[72,128]{1,0:T(1,128)}', space=vmem, size = 0x9000, scoped, tag = 'internal scratch']
  %s0 = inlined_call_operand.hbm [shape: f32[16,128], index: 0, kind: input, shape index: {}]
  %s1 = inlined_call_operand.hbm [shape: f32[16,128], index: 1, kind: output, shape index: {}]
  %s2 = sld [smem:[#allocation0]]
  $region18: #{tpu_custom_call.1} parent=0
    _
  %s4 = ssub.s32 1, %s2
  %s5 = scalar_select 0, %s4, %s2
  $region1: #{tpu_custom_call.1} parent=0
    #allocation2 [shape = 'u8[8192]{0}', space=vmem, size = 0x2000, scoped, tag = 'input window, operand 0, single buffered']
    #allocation3 [shape = 's32[1]{0}', space=sflag, size = 0x4, scoped, tag = 'scoped memory for tpu_custom_call.1']
    #allocation4 [shape = 's32[1]{0}', space=sflag, size = 0x4, scoped, tag = 'scoped memory for tpu_custom_call.1']
    #allocation5 [shape = 'u8[8192]{0}', space=vmem, size = 0x2000, scoped, tag = 'output window, operand 0, single buffered']
    %6 = vsyncpa [#allocation3], 0
    %7 = vsyncpa [#allocation4], 0
    // Predicated region
    $region2: #{tpu_custom_call.1} parent=1 // pred_check
      _
    $region3: #{tpu_custom_call.1} parent=1 // pred_check_branch
      %9 = sbr.rel (0) target = $region5
    $region4: #{tpu_custom_call.1} parent=1 // pred_region
      %11 = vsyncadd [#allocation3], 0
      %s12 = sshll.u32 %s0, 4
      %s13 = int_to_ptr.hbm [resolvable:$true] %s12
      %s14 = sshll.u32 [#allocation2], 4
      %s15 = int_to_ptr.vmem [resolvable:$true] %s14
      %20 = dma.hbm_to_vmem [thread:$0]  %s13, 256, %s15, [#allocation3], 128, 128, 8
    $region5: #{tpu_custom_call.1} parent=1 // pred_fallthru
      _
    // Predicated region
    $region6: #{tpu_custom_call.1} parent=1 // pred_check
      _
    $region7: #{tpu_custom_call.1} parent=1 // pred_check_branch
      %22 = sbr.rel (0) target = $region9
    $region8: #{tpu_custom_call.1} parent=1 // pred_region
      %24 = dma.done [#allocation3], 256
    $region9: #{tpu_custom_call.1} parent=1 // pred_fallthru
      _
    %v25 = vld [vmem:[#allocation2] sm:$0xff]
    %v26 = vld [vmem:[#allocation2 + $0x8] sm:$0xff]
    %v27 = vmul.f32 %v25, 0.16666667
    %v28 = vmul.f32 %v26, 0.16666667
    %v29 = vadd.f32 %v27, 0.5
    %v30 = vadd.f32 %v28, 0.5
    %v31 = vmax.f32 %v29, 0.0
    %v32 = vmax.f32 %v30, 0.0
    %v33 = vmin.f32 %v31, 1.0
    %v34 = vmin.f32 %v32, 1.0
    %35 = vst [vmem:[#allocation5] sm:$0xff] %v33
    %36 = vst [vmem:[#allocation5 + $0x8] sm:$0xff] %v34
    // Predicated region
    $region10: #{tpu_custom_call.1} parent=1 // pred_check
      _
    $region11: #{tpu_custom_call.1} parent=1 // pred_check_branch
      %38 = sbr.rel (0) target = $region13
    $region12: #{tpu_custom_call.1} parent=1 // pred_region
      %40 = vsyncadd [#allocation4], 0
      %s41 = sshll.u32 [#allocation5], 4
      %s42 = int_to_ptr.vmem [resolvable:$true] %s41
      %s43 = sshll.u32 %s1, 4
      %s44 = int_to_ptr.hbm [resolvable:$true] %s43
      %49 = dma.vmem_to_hbm [thread:$0]  %s42, 256, %s44, [#allocation4], 128, 128, 8
    $region13: #{tpu_custom_call.1} parent=1 // pred_fallthru
      _
    // Predicated region
    $region14: #{tpu_custom_call.1} parent=1 // pred_check
      _
    $region15: #{tpu_custom_call.1} parent=1 // pred_check_branch
      %51 = sbr.rel (0) target = $region17
    $region16: #{tpu_custom_call.1} parent=1 // pred_region
      %53 = dma.done [#allocation4], 256
    $region17: #{tpu_custom_call.1} parent=1 // pred_fallthru
      _
    %54 = vsyncpa [#allocation3], 1
    %55 = vsyncpa [#allocation4], 1

</llo_original>
